<compile_context>
chip_gen: v5e
topology: v5e:2x2
jax: 0.10.0
libtpu: 0.0.40
codegen_flags: <defaults>
</compile_context>

<pallas_src>
import jax
import jax.numpy as jnp
from jax.experimental import pallas as pl
from jax.experimental.pallas import tpu as pltpu


def _round_up(x, m):
    return (x + m - 1) // m * m


def _pad_cast(a, shape, dtype):
    """Cast (and zero-pad) only when actually needed."""
    if a.shape == tuple(shape):
        return a if a.dtype == dtype else a.astype(dtype)
    out = jnp.zeros(shape, dtype)
    return out.at[tuple(slice(0, s) for s in a.shape)].set(a.astype(dtype))


def mlp_kernel(x_ref, w1_ref, shift_ref, w2_ref, b2_ref, o_ref):
    """One (batch tile, hid tile) step of relu(x@W1'+shift) @ W2 + b2.

    The output block index is (i, 0): it stays resident across the k axis,
    so we initialize it with b2 at k==0 and accumulate partial products
    directly into it (no VMEM scratch needed).
    """
    k = pl.program_id(1)

    @pl.when(k == 0)
    def _():
        o_ref[...] = jnp.broadcast_to(b2_ref[...], o_ref.shape)

    # Linear1 with folded BN/bias, then ReLU; epilogue kept in f32.
    h = jnp.dot(x_ref[...], w1_ref[...], preferred_element_type=jnp.float32)
    h = jnp.maximum(h + shift_ref[...], 0.0)

    # Dropout (eval mode) -> identity.

    # Partial Linear2 over this hid tile, accumulated into the output block.
    o_ref[...] += jnp.dot(h.astype(w2_ref.dtype), w2_ref[...],
                          preferred_element_type=jnp.float32)


def mlp_forward(x, params, *, bm=512, bk=None, matmul_dtype=jnp.bfloat16,
                eps=1e-5):
    """x: (N, input_dim) float32. params: dict of transposed weights/stats."""
    n, input_dim = x.shape
    hid_dim = params["w1"].shape[1]
    out_dim = params["w2"].shape[1]

    # ---- fold BN (eval mode) + first-layer bias into W1 / one shift vector.
    scale = params["gamma"] * jax.lax.rsqrt(params["var"] + eps)       # (1,hid)
    shift = (params["b1"] - params["mean"]) * scale + params["beta"]   # (1,hid)
    w1_folded = params["w1"] * scale                                   # (in,hid)

    # ---- lane-dense padded dims.
    in_p = _round_up(input_dim, 128)
    hid_p0 = _round_up(hid_dim, 128)
    out_p = _round_up(out_dim, 128)

    # ---- generation-aware VMEM budget.
    try:
        vmem_cap = int(pltpu.get_tpu_info().vmem_capacity_bytes)
    except Exception:
        vmem_cap = 64 * 1024 * 1024          # conservative (v7x per-TC size)
    vmem_limit = int(vmem_cap * 0.9)
    vmem_budget = int(vmem_cap * 0.6)        # headroom for Mosaic internals

    mm_bytes = jnp.dtype(matmul_dtype).itemsize

    # ---- batch tile: multiple of 16 (bf16 sublane packing).
    bm = max(16, min(bm, _round_up(n, 16)))

    def footprint(bm_, bk_):
        """Double-buffered VMEM footprint of one pipeline stage (bytes)."""
        x_buf = 2 * bm_ * in_p * mm_bytes
        w1_buf = 2 * in_p * bk_ * mm_bytes
        sh_buf = 2 * 8 * bk_ * 4             # (1, bk) pads to 8 sublanes
        w2_buf = 2 * bk_ * out_p * mm_bytes
        b2_buf = 2 * 8 * out_p * 4
        o_buf = 2 * bm_ * out_p * 4
        return x_buf + w1_buf + sh_buf + w2_buf + b2_buf + o_buf

    # ---- hid tile: as large as fits (ideally the whole hid dim -> k axis
    #      collapses to one step and weights stay resident across batch tiles).
    bk_cur = hid_p0 if bk is None else min(_round_up(bk, 128), hid_p0)
    bk_cur = max(128, bk_cur)
    while bk_cur > 128 and footprint(bm, bk_cur) > vmem_budget:
        bk_cur -= 128
    # Shrink bm only if even bk=128 doesn't fit (very large in/out dims).
    while bm > 16 and footprint(bm, bk_cur) > vmem_budget:
        bm = max(16, _round_up(bm // 2, 16))

    # ---- keep >=2 batch grid steps when possible so the "parallel" axis
    #      can shard across both v7x TensorCores.
    if _round_up(n, bm) // bm < 2:
        bm2 = max(16, _round_up(-(-n // 2), 16))
        if bm2 < bm:
            bm = bm2

    n_p = _round_up(n, bm)
    hid_p = _round_up(hid_p0, bk_cur)        # pad hid up instead of shrinking bk
    bk_cur = min(bk_cur, hid_p)
    k_steps = hid_p // bk_cur
    n_tiles = n_p // bm

    # ---- build (possibly padded) operands; skip copies when already aligned.
    x_p = _pad_cast(x, (n_p, in_p), matmul_dtype)
    w1_p = _pad_cast(w1_folded, (in_p, hid_p), matmul_dtype)
    shift_p = _pad_cast(shift, (1, hid_p), jnp.float32)
    w2_p = _pad_cast(params["w2"], (hid_p, out_p), matmul_dtype)
    b2_p = _pad_cast(params["b2"], (1, out_p), jnp.float32)

    grid = (n_tiles, k_steps)

    # Weights are re-streamed per batch tile only if the k axis has >1 step.
    weight_passes = 1 if k_steps == 1 else n_tiles
    cost = pl.CostEstimate(
        flops=2 * n_p * (in_p * hid_p + hid_p * out_p),
        transcendentals=0,
        bytes_accessed=(x_p.size * mm_bytes
                        + weight_passes * (w1_p.size + w2_p.size) * mm_bytes
                        + shift_p.size * 4 + b2_p.size * 4
                        + n_p * out_p * 4))

    out = pl.pallas_call(
        mlp_kernel,
        out_shape=jax.ShapeDtypeStruct((n_p, out_p), jnp.float32),
        grid_spec=pltpu.PrefetchScalarGridSpec(
            num_scalar_prefetch=0,
            grid=grid,
            in_specs=[
                pl.BlockSpec((bm, in_p), lambda i, k: (i, 0)),        # x tile
                pl.BlockSpec((in_p, bk_cur), lambda i, k: (0, k)),    # W1' tile
                pl.BlockSpec((1, bk_cur), lambda i, k: (0, k)),       # shift
                pl.BlockSpec((bk_cur, out_p), lambda i, k: (k, 0)),   # W2 tile
                pl.BlockSpec((1, out_p), lambda i, k: (0, 0)),        # b2
            ],
            out_specs=pl.BlockSpec((bm, out_p), lambda i, k: (i, 0)),
        ),
        compiler_params=pltpu.CompilerParams(
            dimension_semantics=("parallel", "arbitrary"),
            vmem_limit_bytes=vmem_limit),
        cost_estimate=cost,
    )(x_p, w1_p, shift_p, w2_p, b2_p)

    return out[:n, :out_dim]


def init_params(key, input_dim, hid_dim, out_dim):
    """Deterministic init mimicking PyTorch Linear/BatchNorm1d defaults."""
    k1, k2, k3, k4 = jax.random.split(key, 4)
    bound1 = 1.0 / jnp.sqrt(input_dim)
    bound2 = 1.0 / jnp.sqrt(hid_dim)
    return {
        # stored already transposed: (in, out)
        "w1": jax.random.uniform(k1, (input_dim, hid_dim), jnp.float32,
                                 -bound1, bound1),
        "b1": jax.random.uniform(k2, (1, hid_dim), jnp.float32,
                                 -bound1, bound1),
        "gamma": jnp.ones((1, hid_dim), jnp.float32),
        "beta": jnp.zeros((1, hid_dim), jnp.float32),
        "mean": jnp.zeros((1, hid_dim), jnp.float32),   # running_mean init
        "var": jnp.ones((1, hid_dim), jnp.float32),     # running_var init
        "w2": jax.random.uniform(k3, (hid_dim, out_dim), jnp.float32,
                                 -bound2, bound2),
        "b2": jax.random.uniform(k4, (1, out_dim), jnp.float32,
                                 -bound2, bound2),
    }


def mlp_reference(x, p, eps=1e-5):
    """Pure-JAX f32 eval-mode reference (unfolded math)."""
    h = x @ p["w1"] + p["b1"]
    h = (h - p["mean"]) * jax.lax.rsqrt(p["var"] + eps) * p["gamma"] + p["beta"]
    h = jnp.maximum(h, 0.0)
    return h @ p["w2"] + p["b2"]


if __name__ == "__main__":
    input_dim, hid_dim, out_dim = 16, 32, 8
    batch = 16

    key = jax.random.PRNGKey(0)
    kx, kp = jax.random.split(key)
    x = jax.random.normal(kx, (batch, input_dim), jnp.float32)
    params = init_params(kp, input_dim, hid_dim, out_dim)

    # BN fold / cast / padding are hoisted into one jitted call path.
    fwd = jax.jit(mlp_forward)
    out = jax.block_until_ready(fwd(x, params))

    ref = mlp_reference(x, params)
    assert out.shape == (batch, out_dim)
    # bf16 matmul operands (f32 accumulation) vs pure-f32 reference.
    assert jnp.allclose(out, ref, atol=3e-2, rtol=3e-2), "mismatch vs reference"
    print("KERNEL_OK")
</pallas_src>

<mosaic_0001>
module attributes {stable_mosaic.version = 11 : i64} {
  func.func @mlp_kernel(%arg0: i32, %arg1: i32, %arg2: memref<16x128xbf16, #tpu.memory_space<vmem>>, %arg3: memref<128x128xbf16, #tpu.memory_space<vmem>>, %arg4: memref<1x128xf32, #tpu.memory_space<vmem>>, %arg5: memref<128x128xbf16, #tpu.memory_space<vmem>>, %arg6: memref<1x128xf32, #tpu.memory_space<vmem>>, %arg7: memref<16x128xf32, #tpu.memory_space<vmem>>) attributes {dimension_semantics = [#tpu.dimension_semantics<parallel>, #tpu.dimension_semantics<arbitrary>], iteration_bounds = array<i64: 1, 1>, scalar_prefetch = 0 : i64, scratch_operands = 0 : i64, tpu.core_type = #tpu.core_type<tc>, window_params = [{transform_indices = @transform_0, window_bounds = array<i64: 16, 128>}, {transform_indices = @transform_1, window_bounds = array<i64: 128, 128>}, {transform_indices = @transform_2, window_bounds = array<i64: 1, 128>}, {transform_indices = @transform_3, window_bounds = array<i64: 128, 128>}, {pipeline_mode = #tpu.pipeline_mode<synchronous>, transform_indices = @transform_4, window_bounds = array<i64: 1, 128>}, {transform_indices = @transform_5, window_bounds = array<i64: 16, 128>}]} {
    %c0_i32 = arith.constant 0 : i32
    %0 = arith.cmpi eq, %arg1, %c0_i32 : i32
    %1 = arith.extui %0 : i1 to i32
    %c0_i32_0 = arith.constant 0 : i32
    %2 = arith.cmpi ne, %1, %c0_i32_0 : i32
    scf.if %2 {
      %c0_14 = arith.constant 0 : index
      %c0_15 = arith.constant 0 : index
      %17 = vector.load %arg6[%c0_14, %c0_15] : memref<1x128xf32, #tpu.memory_space<vmem>>, vector<1x128xf32>
      %18 = vector.shape_cast %17 : vector<1x128xf32> to vector<1x128xf32>
      %19 = vector.broadcast %18 : vector<1x128xf32> to vector<16x128xf32>
      %c0_16 = arith.constant 0 : index
      %c0_17 = arith.constant 0 : index
      %20 = vector.load %arg7[%c0_16, %c0_17] : memref<16x128xf32, #tpu.memory_space<vmem>>, vector<16x128xf32>
      tpu.vector_store %arg7[%c0_16, %c0_17], %19 {strides = array<i32>} : memref<16x128xf32, #tpu.memory_space<vmem>>, vector<16x128xf32>,
    } else {
    }
    %c0 = arith.constant 0 : index
    %c0_1 = arith.constant 0 : index
    %3 = vector.load %arg2[%c0, %c0_1] : memref<16x128xbf16, #tpu.memory_space<vmem>>, vector<16x128xbf16>
    %c0_2 = arith.constant 0 : index
    %c0_3 = arith.constant 0 : index
    %4 = vector.load %arg3[%c0_2, %c0_3] : memref<128x128xbf16, #tpu.memory_space<vmem>>, vector<128x128xbf16>
    %cst = arith.constant dense<0.000000e+00> : vector<16x128xf32>
    %5 = tpu.matmul %3, %4, %cst {dimension_numbers = #tpu.dot_dimension_numbers<[1], [0], [0], [1], [0, 0, 1, 1], [], []>} : vector<16x128xbf16>, vector<128x128xbf16>, vector<16x128xf32> -> vector<16x128xf32>
    %c0_4 = arith.constant 0 : index
    %c0_5 = arith.constant 0 : index
    %6 = vector.load %arg4[%c0_4, %c0_5] : memref<1x128xf32, #tpu.memory_space<vmem>>, vector<1x128xf32>
    %7 = vector.broadcast %6 : vector<1x128xf32> to vector<16x128xf32>
    %8 = arith.addf %5, %7 : vector<16x128xf32>
    %cst_6 = arith.constant 0.000000e+00 : f32
    %9 = vector.broadcast %cst_6 : f32 to vector<16x128xf32>
    %10 = arith.maximumf %8, %9 : vector<16x128xf32>
    %c0_7 = arith.constant 0 : index
    %c0_8 = arith.constant 0 : index
    %11 = vector.load %arg7[%c0_7, %c0_8] : memref<16x128xf32, #tpu.memory_space<vmem>>, vector<16x128xf32>
    %12 = arith.truncf %10 : vector<16x128xf32> to vector<16x128xbf16>
    %c0_9 = arith.constant 0 : index
    %c0_10 = arith.constant 0 : index
    %13 = vector.load %arg5[%c0_9, %c0_10] : memref<128x128xbf16, #tpu.memory_space<vmem>>, vector<128x128xbf16>
    %cst_11 = arith.constant dense<0.000000e+00> : vector<16x128xf32>
    %14 = tpu.matmul %12, %13, %cst_11 {dimension_numbers = #tpu.dot_dimension_numbers<[1], [0], [0], [1], [0, 0, 1, 1], [], []>} : vector<16x128xbf16>, vector<128x128xbf16>, vector<16x128xf32> -> vector<16x128xf32>
    %15 = arith.addf %11, %14 : vector<16x128xf32>
    %c0_12 = arith.constant 0 : index
    %c0_13 = arith.constant 0 : index
    %16 = vector.load %arg7[%c0_12, %c0_13] : memref<16x128xf32, #tpu.memory_space<vmem>>, vector<16x128xf32>
    tpu.vector_store %arg7[%c0_12, %c0_13], %15 {strides = array<i32>} : memref<16x128xf32, #tpu.memory_space<vmem>>, vector<16x128xf32>,
    return
  }
  func.func @transform_0(%arg0: i32, %arg1: i32) -> (i32, i32) {
    %c0_i32 = arith.constant 0 : i32
    %c0_i32_0 = arith.constant 0 : i32
    return %arg0, %c0_i32 : i32, i32
  }
  func.func @transform_1(%arg0: i32, %arg1: i32) -> (i32, i32) {
    %c0_i32 = arith.constant 0 : i32
    %c0_i32_0 = arith.constant 0 : i32
    return %c0_i32, %arg1 : i32, i32
  }
  func.func @transform_2(%arg0: i32, %arg1: i32) -> (i32, i32) {
    %c0_i32 = arith.constant 0 : i32
    %c0_i32_0 = arith.constant 0 : i32
    return %c0_i32, %arg1 : i32, i32
  }
  func.func @transform_3(%arg0: i32, %arg1: i32) -> (i32, i32) {
    %c0_i32 = arith.constant 0 : i32
    %c0_i32_0 = arith.constant 0 : i32
    return %arg1, %c0_i32 : i32, i32
  }
  func.func @transform_4(%arg0: i32, %arg1: i32) -> (i32, i32) {
    %c0_i32 = arith.constant 0 : i32
    %c0_i32_0 = arith.constant 0 : i32
    %c0_i32_1 = arith.constant 0 : i32
    return %c0_i32, %c0_i32_0 : i32, i32
  }
  func.func @transform_5(%arg0: i32, %arg1: i32) -> (i32, i32) {
    %c0_i32 = arith.constant 0 : i32
    %c0_i32_0 = arith.constant 0 : i32
    return %arg0, %c0_i32 : i32, i32
  }
}

</mosaic_0001>

<llo_original>
// kernel: mlp_forward.1
$region0: #{mlp_forward.1}
  #allocation0 [shape = 'u32[]', space=smem, size = 0x4, offset = 0x4, fixed_abs, tag = 'smem constant byte address 0x4 - core index']
  #allocation1 [shape = 'u32[72,128]{1,0:T(1,128)}', space=vmem, size = 0x9000, scoped, tag = 'internal scratch']
  %s0 = inlined_call_operand.vmem [shape: bf16[16,128], index: 0, kind: input, shape index: {}]
  %s1 = inlined_call_operand.vmem [shape: bf16[128,128], index: 1, kind: input, shape index: {}]
  %s2 = inlined_call_operand.vmem [shape: f32[1,128], index: 2, kind: input, shape index: {}]
  %s3 = inlined_call_operand.vmem [shape: bf16[128,128], index: 3, kind: input, shape index: {}]
  %s4 = inlined_call_operand.vmem [shape: f32[1,128], index: 4, kind: input, shape index: {}]
  %s5 = inlined_call_operand.vmem [shape: f32[16,128], index: 5, kind: output, shape index: {}]
  %s6 = sld [smem:[#allocation0]]
  $region34: #{mlp_forward.1} parent=0
    _
  %s8 = ssub.s32 1, %s6
  %s9 = scalar_select 0, %s8, %s6
  // Predicated region
  $region2: #{mlp_forward.1} parent=0 // pred_check
    _
  $region3: #{mlp_forward.1} parent=0 // pred_check_branch
    %11 = sbr.rel (0) target = $region5
  $region4: #{mlp_forward.1} parent=0 // pred_region
    _
  $region5: #{mlp_forward.1} parent=0 // pred_fallthru
    _
  // Predicated region
  $region6: #{mlp_forward.1} parent=0 // pred_check
    _
  $region7: #{mlp_forward.1} parent=0 // pred_check_branch
    %13 = sbr.rel (0) target = $region9
  $region8: #{mlp_forward.1} parent=0 // pred_region
    _
  $region9: #{mlp_forward.1} parent=0 // pred_fallthru
    _
  // Predicated region
  $region10: #{mlp_forward.1} parent=0 // pred_check
    _
  $region11: #{mlp_forward.1} parent=0 // pred_check_branch
    %15 = sbr.rel (0) target = $region13
  $region12: #{mlp_forward.1} parent=0 // pred_region
    _
  $region13: #{mlp_forward.1} parent=0 // pred_fallthru
    _
  // Predicated region
  $region14: #{mlp_forward.1} parent=0 // pred_check
    _
  $region15: #{mlp_forward.1} parent=0 // pred_check_branch
    %17 = sbr.rel (0) target = $region17
  $region16: #{mlp_forward.1} parent=0 // pred_region
    _
  $region17: #{mlp_forward.1} parent=0 // pred_fallthru
    _
  // Predicated region
  $region18: #{mlp_forward.1} parent=0 // pred_check
    _
  $region19: #{mlp_forward.1} parent=0 // pred_check_branch
    %19 = sbr.rel (0) target = $region21
  $region20: #{mlp_forward.1} parent=0 // pred_region
    _
  $region21: #{mlp_forward.1} parent=0 // pred_fallthru
    _
  %p20 = scmp.eq.s32.totalorder 0, 0
  // Predicated region
  $region22: #{mlp_forward.1} parent=0 // pred_check
    %p21 = pneg %p20
  $region23: #{mlp_forward.1} parent=0 // pred_check_branch
    %23 = sbr.rel (%p21) target = $region25
  $region24: #{mlp_forward.1} parent=0 // pred_region
    %v24 = vld [vmem:[%s4] sm:$0x1]
    %v26 = vperm.slane %v24, 0
    %28 = vst [vmem:[%s5] sm:$0xff] %v26
    %29 = vst [vmem:[%s5 + $0x8] sm:$0xff] %v26
  $region25: #{mlp_forward.1} parent=0 // pred_fallthru
    _
  %v30 = vld [vmem:[%s0] sm:$0xf]
  %v31 = vld [vmem:[%s0 + $0x4] sm:$0xf]
  %v32 = vld [vmem:[%s1] sm:$0xf]
  %v33 = vld [vmem:[%s1 + $0x4] sm:$0xf]
  %v34 = vld [vmem:[%s1 + $0x8] sm:$0xf]
  %v35 = vld [vmem:[%s1 + $0xc] sm:$0xf]
  %v36 = vld [vmem:[%s1 + $0x10] sm:$0xf]
  %v37 = vld [vmem:[%s1 + $0x14] sm:$0xf]
  %v38 = vld [vmem:[%s1 + $0x18] sm:$0xf]
  %v39 = vld [vmem:[%s1 + $0x1c] sm:$0xf]
  %v40 = vld [vmem:[%s1 + $0x20] sm:$0xf]
  %v41 = vld [vmem:[%s1 + $0x24] sm:$0xf]
  %v42 = vld [vmem:[%s1 + $0x28] sm:$0xf]
  %v43 = vld [vmem:[%s1 + $0x2c] sm:$0xf]
  %v44 = vld [vmem:[%s1 + $0x30] sm:$0xf]
  %v45 = vld [vmem:[%s1 + $0x34] sm:$0xf]
  %v46 = vld [vmem:[%s1 + $0x38] sm:$0xf]
  %v47 = vld [vmem:[%s1 + $0x3c] sm:$0xf]
  %v48 = vld [vmem:[%s2] sm:$0x1]
  %v50 = vperm.slane %v48, 0
  %v54 = vunpack.c.l.b16 %v30
  %v55 = vunpack.c.l.b16 %v31
  %v56 = vpack.c.b16 %v55, %v54
  %v74 = vunpack.c.l.b16 %v32
  %v75 = vunpack.c.l.b16 %v33
  %v76 = vunpack.c.l.b16 %v34
  %v77 = vunpack.c.l.b16 %v35
  %v78 = vunpack.c.l.b16 %v36
  %v79 = vunpack.c.l.b16 %v37
  %v80 = vunpack.c.l.b16 %v38
  %v81 = vunpack.c.l.b16 %v39
  %v82 = vunpack.c.l.b16 %v40
  %v83 = vunpack.c.l.b16 %v41
  %v84 = vunpack.c.l.b16 %v42
  %v85 = vunpack.c.l.b16 %v43
  %v86 = vunpack.c.l.b16 %v44
  %v87 = vunpack.c.l.b16 %v45
  %v88 = vunpack.c.l.b16 %v46
  %v89 = vunpack.c.l.b16 %v47
  %v90 = vpack.c.b16 %v75, %v74
  %v91 = vpack.c.b16 %v77, %v76
  %v92 = vpack.c.b16 %v79, %v78
  %v93 = vpack.c.b16 %v81, %v80
  %v94 = vpack.c.b16 %v83, %v82
  %v95 = vpack.c.b16 %v85, %v84
  %v96 = vpack.c.b16 %v87, %v86
  %v97 = vpack.c.b16 %v89, %v88
  %106 = vmatpush.bf16.msra.mxu0 %v97
  %107 = vmatpush.bf16.msra.mxu0 %v96
  %108 = vmatpush.bf16.msra.mxu0 %v95
  %109 = vmatpush.bf16.msra.mxu0 %v94
  %110 = vmatpush.bf16.msra.mxu0 %v93
  %111 = vmatpush.bf16.msra.mxu0 %v92
  %112 = vmatpush.bf16.msra.mxu0 %v91
  %113 = vmatpush.bf16.msra.mxu0 %v90
  %114 = vmatmul.bf16.gmra.mxu0 %v56
  %v115 = vpop.f32.mrf.mxu0
  %v116 = vadd.f32 %v50, %v115
  %v117 = vpop.f32.mrf.mxu0
  %v118 = vadd.f32 %v50, %v117
  %119 = vdwg.mxu0
  %v120 = vmax.f32 %v116, 0.0
  %v121 = vmax.f32 %v118, 0.0
  %v122 = vld [vmem:[%s5] sm:$0xff]
  %v123 = vld [vmem:[%s5 + $0x8] sm:$0xff]
  %v124 = vpack.c.bf16 %v121, %v120
  %v125 = vld [vmem:[%s3] sm:$0xf]
  %v126 = vld [vmem:[%s3 + $0x4] sm:$0xf]
  %v127 = vld [vmem:[%s3 + $0x8] sm:$0xf]
  %v128 = vld [vmem:[%s3 + $0xc] sm:$0xf]
  %v129 = vld [vmem:[%s3 + $0x10] sm:$0xf]
  %v130 = vld [vmem:[%s3 + $0x14] sm:$0xf]
  %v131 = vld [vmem:[%s3 + $0x18] sm:$0xf]
  %v132 = vld [vmem:[%s3 + $0x1c] sm:$0xf]
  %v133 = vld [vmem:[%s3 + $0x20] sm:$0xf]
  %v134 = vld [vmem:[%s3 + $0x24] sm:$0xf]
  %v135 = vld [vmem:[%s3 + $0x28] sm:$0xf]
  %v136 = vld [vmem:[%s3 + $0x2c] sm:$0xf]
  %v137 = vld [vmem:[%s3 + $0x30] sm:$0xf]
  %v138 = vld [vmem:[%s3 + $0x34] sm:$0xf]
  %v139 = vld [vmem:[%s3 + $0x38] sm:$0xf]
  %v140 = vld [vmem:[%s3 + $0x3c] sm:$0xf]
  %v157 = vunpack.c.l.b16 %v125
  %v158 = vunpack.c.l.b16 %v126
  %v159 = vunpack.c.l.b16 %v127
  %v160 = vunpack.c.l.b16 %v128
  %v161 = vunpack.c.l.b16 %v129
  %v162 = vunpack.c.l.b16 %v130
  %v163 = vunpack.c.l.b16 %v131
  %v164 = vunpack.c.l.b16 %v132
  %v165 = vunpack.c.l.b16 %v133
  %v166 = vunpack.c.l.b16 %v134
  %v167 = vunpack.c.l.b16 %v135
  %v168 = vunpack.c.l.b16 %v136
  %v169 = vunpack.c.l.b16 %v137
  %v170 = vunpack.c.l.b16 %v138
  %v171 = vunpack.c.l.b16 %v139
  %v172 = vunpack.c.l.b16 %v140
  %v173 = vpack.c.b16 %v158, %v157
  %v174 = vpack.c.b16 %v160, %v159
  %v175 = vpack.c.b16 %v162, %v161
  %v176 = vpack.c.b16 %v164, %v163
  %v177 = vpack.c.b16 %v166, %v165
  %v178 = vpack.c.b16 %v168, %v167
  %v179 = vpack.c.b16 %v170, %v169
  %v180 = vpack.c.b16 %v172, %v171
  %189 = vmatpush.bf16.msra.mxu0 %v180
  %190 = vmatpush.bf16.msra.mxu0 %v179
  %191 = vmatpush.bf16.msra.mxu0 %v178
  %192 = vmatpush.bf16.msra.mxu0 %v177
  %193 = vmatpush.bf16.msra.mxu0 %v176
  %194 = vmatpush.bf16.msra.mxu0 %v175
  %195 = vmatpush.bf16.msra.mxu0 %v174
  %196 = vmatpush.bf16.msra.mxu0 %v173
  %197 = vmatmul.bf16.gmra.mxu0 %v124
  %v198 = vpop.f32.mrf.mxu0
  %v199 = vadd.f32 0.0, %v198
  %v200 = vpop.f32.mrf.mxu0
  %v201 = vadd.f32 0.0, %v200
  %202 = vdwg.mxu0
  %v203 = vadd.f32 %v122, %v199
  %v204 = vadd.f32 %v123, %v201
  %205 = vst [vmem:[%s5] sm:$0xff] %v203
  %206 = vst [vmem:[%s5 + $0x8] sm:$0xff] %v204
  // Predicated region
  $region26: #{mlp_forward.1} parent=0 // pred_check
    _
  $region27: #{mlp_forward.1} parent=0 // pred_check_branch
    %208 = sbr.rel (0) target = $region29
  $region28: #{mlp_forward.1} parent=0 // pred_region
    _
  $region29: #{mlp_forward.1} parent=0 // pred_fallthru
    _
  // Predicated region
  $region30: #{mlp_forward.1} parent=0 // pred_check
    _
  $region31: #{mlp_forward.1} parent=0 // pred_check_branch
    %210 = sbr.rel (0) target = $region33
  $region32: #{mlp_forward.1} parent=0 // pred_region
    _
  $region33: #{mlp_forward.1} parent=0 // pred_fallthru
    _

</llo_original>
